<compile_context>
chip_gen: v5e
topology: v5e:2x2
jax: 0.10.0
libtpu: 0.0.40
codegen_flags: <defaults>
</compile_context>

<pallas_src>
import functools
import math

import jax
import jax.numpy as jnp
from jax.experimental import pallas as pl
from jax.experimental.pallas import tpu as pltpu


def _lora_kernel(x_ref, a_ref, b_ref, o_ref, *, scaling):
    # x_ref: (TM, K), a_ref: (K, R), b_ref: (R, TN), o_ref: (TM, TN)
    xa = jnp.dot(x_ref[...], a_ref[...], preferred_element_type=jnp.float32)
    # lora_dropout with p == 0.0 is nn.Identity -> nothing to do.
    # TODO(synk): for p > 0 training-mode dropout, seed pltpu.prng_seed and mask
    # `xa` with pltpu.stateful_bernoulli here.
    # Scale the (TM, R) intermediate instead of the (TM, TN) output: same math,
    # ~N/R fewer VALU multiplies per tile.
    xa = xa * scaling
    y = jnp.dot(xa.astype(b_ref.dtype), b_ref[...],
                preferred_element_type=jnp.float32)
    o_ref[...] = y.astype(o_ref.dtype)


def _pick_tile(dim, preferred, align):
    """Largest tile <= preferred that divides `dim` and is a multiple of `align`,
    falling back to the full dim (full-extent blocks are always legal)."""
    if dim <= preferred:
        return dim
    t = (preferred // align) * align
    while t >= align:
        if dim % t == 0:
            return t
        t -= align
    return dim


def lora_forward(x2d, a_t, b_t, scaling, *, tm_pref=256, tn_pref=512):
    """x2d: (M, in_features); a_t: (in_features, r); b_t: (r, out_features)."""
    M, K = x2d.shape
    Kr, R = a_t.shape
    Rb, N = b_t.shape
    assert K == Kr and R == Rb

    TM = _pick_tile(M, tm_pref, 8)      # sublane-aligned (or full M)
    TN = _pick_tile(N, tn_pref, 128)    # lane-dense output (or full N)
    grid = (M // TM, N // TN)           # N inner: x tile stays resident across it

    kernel = functools.partial(_lora_kernel, scaling=float(scaling))

    itemsize = jnp.dtype(x2d.dtype).itemsize
    cost = pl.CostEstimate(
        flops=2 * M * K * R + 2 * M * R * N,
        bytes_accessed=itemsize * (M * K + K * R + R * N + M * N),
        transcendentals=0,
    )

    return pl.pallas_call(
        kernel,
        out_shape=jax.ShapeDtypeStruct((M, N), x2d.dtype),
        grid=grid,
        in_specs=[
            pl.BlockSpec((TM, K), lambda i, j: (i, 0)),   # x tile (re-used over j)
            pl.BlockSpec((K, R), lambda i, j: (0, 0)),    # A^T: constant block, resident
            pl.BlockSpec((R, TN), lambda i, j: (0, j)),   # B^T tile
        ],
        out_specs=pl.BlockSpec((TM, TN), lambda i, j: (i, j)),
        compiler_params=pltpu.CompilerParams(
            # No reduction axis -> both parallel; shards across TCs on v7x.
            dimension_semantics=("parallel", "parallel"),
            vmem_limit_bytes=48 * 1024 * 1024,
        ),
        cost_estimate=cost,
    )(x2d, a_t, b_t)


def init_lora_params(key, in_features, out_features, r):
    """Matches reset_lora_parameters: kaiming_uniform_(a=sqrt(5)) on a
    (fan_out, fan_in) weight is U(-1/sqrt(fan_in), 1/sqrt(fan_in))."""
    ka, kb = jax.random.split(key)
    bound_a = 1.0 / math.sqrt(in_features)   # fan_in of lora_A.weight (r, in_features)
    bound_b = 1.0 / math.sqrt(r)             # fan_in of lora_B.weight (out_features, r)
    # Stored already transposed for the kernel (lane axis = feature axis).
    a_t = jax.random.uniform(ka, (in_features, r), jnp.float32,
                             minval=-bound_a, maxval=bound_a)
    b_t = jax.random.uniform(kb, (r, out_features), jnp.float32,
                             minval=-bound_b, maxval=bound_b)
    return a_t, b_t


if __name__ == "__main__":
    # Small shapes consistent with the module's forward (Linear on the last dim),
    # big enough that the M tiling actually produces a multi-step grid.
    batch, seq = 2, 256          # leading dims, flattened into M = 512
    in_features = 256
    out_features = 256           # multiple of 128 -> lane-dense output stores
    r = 8
    lora_alpha = 16
    lora_dropout_p = 0.0         # -> nn.Identity
    scaling = lora_alpha / r

    key = jax.random.PRNGKey(0)
    kx, kw = jax.random.split(key)
    x = jax.random.normal(kx, (batch, seq, in_features), dtype=jnp.float32)
    a_t, b_t = init_lora_params(kw, in_features, out_features, r)

    # Flatten leading dims (PyTorch Linear applies to the last dim).
    x2d = x.reshape(-1, in_features)
    y2d = lora_forward(x2d, a_t, b_t, scaling)
    y = y2d.reshape(batch, seq, out_features)
    jax.block_until_ready(y)

    # Reference check in plain JAX (scaling commutes through the second matmul;
    # only last-ulp f32 differences expected).
    y_ref = (x2d @ a_t) @ b_t * scaling
    assert jnp.allclose(y2d, y_ref, atol=1e-4, rtol=1e-5), "mismatch vs reference"

    print("KERNEL_OK")
</pallas_src>

<mosaic_0001>
module attributes {stable_mosaic.version = 11 : i64} {
  func.func @_lora_kernel(%arg0: i32, %arg1: i32, %arg2: memref<256x256xf32, #tpu.memory_space<vmem>>, %arg3: memref<256x8xf32, #tpu.memory_space<vmem>>, %arg4: memref<8x256xf32, #tpu.memory_space<vmem>>, %arg5: memref<256x256xf32, #tpu.memory_space<vmem>>) attributes {dimension_semantics = [#tpu.dimension_semantics<parallel>, #tpu.dimension_semantics<parallel>], iteration_bounds = array<i64: 2, 1>, scalar_prefetch = 0 : i64, scratch_operands = 0 : i64, tpu.core_type = #tpu.core_type<tc>, window_params = [{transform_indices = @transform_0, window_bounds = array<i64: 256, 256>}, {pipeline_mode = #tpu.pipeline_mode<synchronous>, transform_indices = @transform_1, window_bounds = array<i64: 256, 8>}, {transform_indices = @transform_2, window_bounds = array<i64: 8, 256>}, {transform_indices = @transform_3, window_bounds = array<i64: 256, 256>}]} {
    %c0 = arith.constant 0 : index
    %c0_0 = arith.constant 0 : index
    %0 = vector.load %arg2[%c0, %c0_0] : memref<256x256xf32, #tpu.memory_space<vmem>>, vector<256x256xf32>
    %c0_1 = arith.constant 0 : index
    %c0_2 = arith.constant 0 : index
    %1 = vector.load %arg3[%c0_1, %c0_2] : memref<256x8xf32, #tpu.memory_space<vmem>>, vector<256x8xf32>
    %cst = arith.constant dense<0.000000e+00> : vector<256x8xf32>
    %2 = tpu.matmul %0, %1, %cst {dimension_numbers = #tpu.dot_dimension_numbers<[1], [0], [0], [1], [0, 0, 1, 1], [], []>} : vector<256x256xf32>, vector<256x8xf32>, vector<256x8xf32> -> vector<256x8xf32>
    %cst_3 = arith.constant 2.000000e+00 : f32
    %3 = vector.broadcast %cst_3 : f32 to vector<256x8xf32>
    %4 = arith.mulf %2, %3 : vector<256x8xf32>
    %c0_4 = arith.constant 0 : index
    %c0_5 = arith.constant 0 : index
    %5 = vector.load %arg4[%c0_4, %c0_5] : memref<8x256xf32, #tpu.memory_space<vmem>>, vector<8x256xf32>
    %cst_6 = arith.constant dense<0.000000e+00> : vector<256x256xf32>
    %6 = tpu.matmul %4, %5, %cst_6 {dimension_numbers = #tpu.dot_dimension_numbers<[1], [0], [0], [1], [0, 0, 1, 1], [], []>} : vector<256x8xf32>, vector<8x256xf32>, vector<256x256xf32> -> vector<256x256xf32>
    %c0_7 = arith.constant 0 : index
    %c0_8 = arith.constant 0 : index
    %7 = vector.load %arg5[%c0_7, %c0_8] : memref<256x256xf32, #tpu.memory_space<vmem>>, vector<256x256xf32>
    tpu.vector_store %arg5[%c0_7, %c0_8], %6 {strides = array<i32>} : memref<256x256xf32, #tpu.memory_space<vmem>>, vector<256x256xf32>,
    return
  }
  func.func @transform_0(%arg0: i32, %arg1: i32) -> (i32, i32) {
    %c0_i32 = arith.constant 0 : i32
    %c0_i32_0 = arith.constant 0 : i32
    return %arg0, %c0_i32 : i32, i32
  }
  func.func @transform_1(%arg0: i32, %arg1: i32) -> (i32, i32) {
    %c0_i32 = arith.constant 0 : i32
    %c0_i32_0 = arith.constant 0 : i32
    %c0_i32_1 = arith.constant 0 : i32
    return %c0_i32, %c0_i32_0 : i32, i32
  }
  func.func @transform_2(%arg0: i32, %arg1: i32) -> (i32, i32) {
    %c0_i32 = arith.constant 0 : i32
    %c0_i32_0 = arith.constant 0 : i32
    return %c0_i32, %arg1 : i32, i32
  }
  func.func @transform_3(%arg0: i32, %arg1: i32) -> (i32, i32) {
    %c0_i32 = arith.constant 0 : i32
    return %arg0, %arg1 : i32, i32
  }
}

</mosaic_0001>

<llo_original>
// kernel: tpu_custom_call.1
$region0: #{tpu_custom_call.1}
  #allocation0 [shape = 'u32[]', space=smem, size = 0x4, offset = 0x4, fixed_abs, tag = 'smem constant byte address 0x4 - core index']
  #allocation1 [shape = 'u32[72,128]{1,0:T(1,128)}', space=vmem, size = 0x9000, scoped, tag = 'internal scratch']
  %s0 = inlined_call_operand.hbm [shape: f32[512,256], index: 0, kind: input, shape index: {}]
  %s1 = inlined_call_operand.vmem [shape: f32[256,8], index: 1, kind: input, shape index: {}]
  %s2 = inlined_call_operand.vmem [shape: f32[8,256], index: 2, kind: input, shape index: {}]
  %s3 = inlined_call_operand.hbm [shape: f32[512,256], index: 3, kind: output, shape index: {}]
  %s4 = sld [smem:[#allocation0]]
  $region49: #{tpu_custom_call.1} parent=0
    _
  %s6 = ssub.s32 1, %s4
  %s7 = scalar_select 0, %s6, %s4
  $region1: #{tpu_custom_call.1} parent=0
    #allocation2 [shape = 'u8[524288]{0}', space=vmem, size = 0x80000, scoped, tag = 'input window, operand 0']
    #allocation3 [shape = 's32[2]{0}', space=sflag, size = 0x8, scoped, tag = 'scoped memory for tpu_custom_call.1']
    #allocation4 [shape = 's32[2]{0}', space=sflag, size = 0x8, scoped, tag = 'scoped memory for tpu_custom_call.1']
    #allocation5 [shape = 'u8[524288]{0}', space=vmem, size = 0x80000, scoped, tag = 'output window, operand 0']
    %8 = vsyncpa [#allocation3], 0
    %s9 = scalar_lea.sflag [#allocation3], 1
    %10 = vsyncpa %s9, 0
    %11 = vsyncpa [#allocation4], 0
    %s12 = scalar_lea.sflag [#allocation4], 1
    %13 = vsyncpa %s12, 0
    loop: start=0, step=1, limit=4
    $region2: #{tpu_custom_call.1} parent=1 // loop_pre_header
      _
    $region3: #{tpu_custom_call.1} parent=1 // loop_header
      %s15 = sphi 0, %s19
      %p16 = scmp.ge.s32.totalorder %s15, 4
      %s22 = sphi 0, %s34
      %s23 = sphi 0, %s30
      %s24 = sphi 0, %s22
      %s25 = sphi 0, %s23
      %s26 = sphi 0, %s24
      %s27 = sphi 0, %s25
      %s37 = sphi 0, %s39
      %s40 = sphi 0, %s37
      %s41 = sphi 0, %s40
      %s57 = sphi 0, %s41
      %s61 = sphi 0, %s61
      %s63 = sphi 0, %s61
      %s64 = sphi 0, %s63
      %s78 = sphi 0, %s64
      %s84 = sphi 0, %s86
      %s87 = sphi 0, %s84
      %s88 = sphi 0, %s87
      %s104 = sphi 0, %s88
      %s112 = sphi 0, %s114
      %s115 = sphi 0, %s112
      %s116 = sphi 0, %s115
      %s132 = sphi 0, %s116
    $region4: #{tpu_custom_call.1} parent=1 // loop_header_branch
      %18 = sbr.rel (%p16) target = $region8
    $region5: #{tpu_custom_call.1} parent=1 // loop_body
      %s20 = ssub.s32 %s15, 1
      %s21 = ssub.s32 %s15, 2
      %s28 = sadd.s32 1, %s23
      %p29 = scmp.ge.s32.totalorder %s28, 1
      %s30 = scalar_select %p29, 0, %s28
      %s31 = sadd.s32 1, %s22
      %s32 = scalar_select %p29, %s31, %s22
      %p33 = scmp.ge.s32.totalorder %s32, 2
      %s34 = scalar_select %p33, 0, %s32
      %s35 = ssub.s32 %s22, %s34
      %p36 = scmp.eq.s32.totalorder %s35, 0
      %s38 = sadd.s32 %s37, 1
      %s39 = scalar_select %p36, %s37, %s38
      %p42 = pneg %p36
      %p43 = scmp.eq.s32.totalorder %s15, 1
      %p44 = por %p42, %p43
      %p45 = scmp.ne.s32.totalorder %s37, %s40
      %p46 = scmp.eq.s32.totalorder %s15, 0
      %p47 = por %p45, %p46
      %p48 = scmp.ne.s32.totalorder %s37, %s40
      %p49 = scmp.eq.s32.totalorder %s20, 1
      %p50 = por %p48, %p49
      %p51 = scmp.ne.s32.totalorder %s40, %s41
      %p52 = scmp.eq.s32.totalorder %s20, 0
      %p53 = por %p51, %p52
      %p54 = scmp.ne.s32.totalorder %s40, %s41
      %p55 = scmp.eq.s32.totalorder %s21, 1
      %p56 = por %p54, %p55
      %p58 = scmp.ne.s32.totalorder %s41, %s57
      %p59 = scmp.eq.s32.totalorder %s21, 0
      %p60 = por %p58, %p59
      %s62 = sadd.s32 %s61, 1
      %p65 = scmp.eq.s32.totalorder %s15, 1
      %p66 = scmp.ne.s32.totalorder %s61, %s63
      %p67 = scmp.eq.s32.totalorder %s15, 0
      %p68 = por %p66, %p67
      %p69 = scmp.ne.s32.totalorder %s61, %s63
      %p70 = scmp.eq.s32.totalorder %s20, 1
      %p71 = por %p69, %p70
      %p72 = scmp.ne.s32.totalorder %s63, %s64
      %p73 = scmp.eq.s32.totalorder %s20, 0
      %p74 = por %p72, %p73
      %p75 = scmp.ne.s32.totalorder %s63, %s64
      %p76 = scmp.eq.s32.totalorder %s21, 1
      %p77 = por %p75, %p76
      %p79 = scmp.ne.s32.totalorder %s64, %s78
      %p80 = scmp.eq.s32.totalorder %s21, 0
      %p81 = por %p79, %p80
      %s82 = ssub.s32 %s23, %s30
      %p83 = scmp.eq.s32.totalorder %s82, 0
      %s85 = sadd.s32 %s84, 1
      %s86 = scalar_select %p83, %s84, %s85
      %p89 = pneg %p83
      %p90 = scmp.eq.s32.totalorder %s15, 1
      %p91 = por %p89, %p90
      %p92 = scmp.ne.s32.totalorder %s84, %s87
      %p93 = scmp.eq.s32.totalorder %s15, 0
      %p94 = por %p92, %p93
      %p95 = scmp.ne.s32.totalorder %s84, %s87
      %p96 = scmp.eq.s32.totalorder %s20, 1
      %p97 = por %p95, %p96
      %p98 = scmp.ne.s32.totalorder %s87, %s88
      %p99 = scmp.eq.s32.totalorder %s20, 0
      %p100 = por %p98, %p99
      %p101 = scmp.ne.s32.totalorder %s87, %s88
      %p102 = scmp.eq.s32.totalorder %s21, 1
      %p103 = por %p101, %p102
      %p105 = scmp.ne.s32.totalorder %s88, %s104
      %p106 = scmp.eq.s32.totalorder %s21, 0
      %p107 = por %p105, %p106
      %s108 = ssub.s32 %s22, %s34
      %s109 = ssub.s32 %s23, %s30
      %s110 = sor.u32 %s108, %s109
      %p111 = scmp.eq.s32.totalorder %s110, 0
      %s113 = sadd.s32 %s112, 1
      %s114 = scalar_select %p111, %s112, %s113
      %p117 = pneg %p111
      %p118 = scmp.eq.s32.totalorder %s15, 1
      %p119 = por %p117, %p118
      %p120 = scmp.ne.s32.totalorder %s112, %s115
      %p121 = scmp.eq.s32.totalorder %s15, 0
      %p122 = por %p120, %p121
      %p123 = scmp.ne.s32.totalorder %s112, %s115
      %p124 = scmp.eq.s32.totalorder %s20, 1
      %p125 = por %p123, %p124
      %p126 = scmp.ne.s32.totalorder %s115, %s116
      %p127 = scmp.eq.s32.totalorder %s20, 0
      %p128 = por %p126, %p127
      %p129 = scmp.ne.s32.totalorder %s115, %s116
      %p130 = scmp.eq.s32.totalorder %s21, 1
      %p131 = por %p129, %p130
      %p133 = scmp.ne.s32.totalorder %s116, %s132
      %p134 = scmp.eq.s32.totalorder %s21, 0
      %p135 = por %p133, %p134
      %p136 = scmp.le.s32.totalorder 1, %s15
      %p137 = scmp.lt.s32.totalorder %s15, 3
      %p138 = pnand %p136, %p137
      %p139 = pneg %p138
      // Predicated region
      $region9: #{tpu_custom_call.1} parent=5 // pred_check
        _
      $region10: #{tpu_custom_call.1} parent=5 // pred_check_branch
        %141 = sbr.rel (%p138) target = $region12
      $region11: #{tpu_custom_call.1} parent=5 // pred_region
        %s142 = ssub.s32 %s15, 1
        // Predicated region
        $region13: #{tpu_custom_call.1} parent=11 // pred_check
          %p143 = pneg %p74
        $region14: #{tpu_custom_call.1} parent=11 // pred_check_branch
          %145 = sbr.rel (%p143) target = $region16
        $region15: #{tpu_custom_call.1} parent=11 // pred_region
          _
        $region16: #{tpu_custom_call.1} parent=11 // pred_fallthru
          _
        // Predicated region
        $region17: #{tpu_custom_call.1} parent=11 // pred_check
          %p146 = pneg %p100
        $region18: #{tpu_custom_call.1} parent=11 // pred_check_branch
          %148 = sbr.rel (%p146) target = $region20
        $region19: #{tpu_custom_call.1} parent=11 // pred_region
          %s149 = smul.u32 2, %s25
          %p150 = scmp.lt.s32.totalorder %s149, 1
          %s151 = scalar_select %p150, %s149, 1
          %s152 = smul.addr %s151, 8
          %s153 = scalar_lea.vmem %s2, %s152
          %s154 = smul.u32 2, %s25
        $region20: #{tpu_custom_call.1} parent=11 // pred_fallthru
          _
      $region12: #{tpu_custom_call.1} parent=5 // pred_fallthru
        _
      %p155 = scmp.lt.s32.totalorder %s15, 2
      // Predicated region
      $region21: #{tpu_custom_call.1} parent=5 // pred_check
        %p156 = pneg %p155
      $region22: #{tpu_custom_call.1} parent=5 // pred_check_branch
        %158 = sbr.rel (%p156) target = $region24
      $region23: #{tpu_custom_call.1} parent=5 // pred_region
        // Predicated region
        $region25: #{tpu_custom_call.1} parent=23 // pred_check
          %p159 = pneg %p47
        $region26: #{tpu_custom_call.1} parent=23 // pred_check_branch
          %161 = sbr.rel (%p159) target = $region28
        $region27: #{tpu_custom_call.1} parent=23 // pred_region
          %s162 = sand.u32 %s37, 1
          %s163 = scalar_lea.sflag [#allocation3], %s162
          %s164 = sand.u32 %s37, 1
          %s165 = smul.addr %s164, 512
          %s166 = scalar_lea.vmem [#allocation2], %s165
          %s167 = smul.u32 32, %s22
          %169 = vsyncadd %s163, 0
          %s170 = smul.addr %s167, 2
          %s171 = smul.addr %s170, 8
          %s172 = scalar_lea.hbm %s0, %s171
          %s173 = sshll.u32 %s172, 4
          %s174 = int_to_ptr.hbm [resolvable:$true] %s173
          %s175 = sshll.u32 %s166, 4
          %s176 = int_to_ptr.vmem [resolvable:$true] %s175
          %181 = dma.hbm_to_vmem [thread:$0]  %s174, 8192, %s176, %s163, 256, 256, 16
        $region28: #{tpu_custom_call.1} parent=23 // pred_fallthru
          _
      $region24: #{tpu_custom_call.1} parent=5 // pred_fallthru
        _
      %p182 = scmp.le.s32.totalorder 1, %s15
      %p183 = scmp.lt.s32.totalorder %s15, 3
      %p184 = pnand %p182, %p183
      %p185 = pneg %p184
      // Predicated region
      $region29: #{tpu_custom_call.1} parent=5 // pred_check
        _
      $region30: #{tpu_custom_call.1} parent=5 // pred_check_branch
        %187 = sbr.rel (%p184) target = $region32
      $region31: #{tpu_custom_call.1} parent=5 // pred_region
        %s188 = ssub.s32 %s15, 1
        %s189 = sand.u32 %s40, 1
        %s190 = scalar_lea.sflag [#allocation3], %s189
        %s191 = sand.u32 %s40, 1
        %s192 = smul.addr %s191, 512
        %s193 = scalar_lea.vmem [#allocation2], %s192
        // Predicated region
        $region33: #{tpu_custom_call.1} parent=31 // pred_check
          %p194 = pneg %p53
        $region34: #{tpu_custom_call.1} parent=31 // pred_check_branch
          %196 = sbr.rel (%p194) target = $region36
        $region35: #{tpu_custom_call.1} parent=31 // pred_region
          %198 = dma.done %s190, 8192
        $region36: #{tpu_custom_call.1} parent=31 // pred_fallthru
          _
        %s199 = sand.u32 %s40, 1
        %s200 = scalar_lea.sflag [#allocation3], %s199
        %s201 = sand.u32 %s40, 1
        %s202 = smul.addr %s201, 512
        %s203 = scalar_lea.vmem [#allocation2], %s202
        %p204 = pneg %p53
        %p205 = pneg %p50
        %p206 = pneg %p74
        %p207 = pneg %p71
        %s208 = smul.u32 2, %s25
        %p209 = scmp.lt.s32.totalorder %s208, 1
        %s210 = scalar_select %p209, %s208, 1
        %s211 = smul.addr %s210, 8
        %s212 = scalar_lea.vmem %s2, %s211
        %p213 = pneg %p100
        %p214 = pneg %p97
        %p215 = pneg %p128
        %p216 = pneg %p125
        %s217 = sand.u32 %s115, 1
        %s218 = scalar_lea.sflag [#allocation4], %s217
        %s219 = sand.u32 %s115, 1
        %s220 = smul.addr %s219, 512
        %s221 = scalar_lea.vmem [#allocation5], %s220
        %s222 = smul.u32 32, %s24
        %s223 = smul.u32 2, %s25
        %p224 = scmp.lt.s32.totalorder %s223, 1
        %s225 = scalar_select %p224, %s223, 1
        %s226 = smul.addr %s225, 8
        %s227 = scalar_lea.vmem %s2, %s226
        %s228 = smul.u32 2, %s25
        %s229 = smul.u32 32, %s24
        %s230 = smul.u32 2, %s25
        %v231 = vld [vmem:[%s193] sm:$0xff]
        %v232 = vld [vmem:[%s193 + $0x8] sm:$0xff]
        %v233 = vld [vmem:[%s193 + $0x10] sm:$0xff]
        %v234 = vld [vmem:[%s193 + $0x18] sm:$0xff]
        %v235 = vld [vmem:[%s193 + $0x20] sm:$0xff]
        %v236 = vld [vmem:[%s193 + $0x28] sm:$0xff]
        %v237 = vld [vmem:[%s193 + $0x30] sm:$0xff]
        %v238 = vld [vmem:[%s193 + $0x38] sm:$0xff]
        %v239 = vld [vmem:[%s193 + $0x40] sm:$0xff]
        %v240 = vld [vmem:[%s193 + $0x48] sm:$0xff]
        %v241 = vld [vmem:[%s193 + $0x50] sm:$0xff]
        %v242 = vld [vmem:[%s193 + $0x58] sm:$0xff]
        %v243 = vld [vmem:[%s193 + $0x60] sm:$0xff]
        %v244 = vld [vmem:[%s193 + $0x68] sm:$0xff]
        %v245 = vld [vmem:[%s193 + $0x70] sm:$0xff]
        %v246 = vld [vmem:[%s193 + $0x78] sm:$0xff]
        %v247 = vld [vmem:[%s193 + $0x80] sm:$0xff]
        %v248 = vld [vmem:[%s193 + $0x88] sm:$0xff]
        %v249 = vld [vmem:[%s193 + $0x90] sm:$0xff]
        %v250 = vld [vmem:[%s193 + $0x98] sm:$0xff]
        %v251 = vld [vmem:[%s193 + $0xa0] sm:$0xff]
        %v252 = vld [vmem:[%s193 + $0xa8] sm:$0xff]
        %v253 = vld [vmem:[%s193 + $0xb0] sm:$0xff]
        %v254 = vld [vmem:[%s193 + $0xb8] sm:$0xff]
        %v255 = vld [vmem:[%s193 + $0xc0] sm:$0xff]
        %v256 = vld [vmem:[%s193 + $0xc8] sm:$0xff]
        %v257 = vld [vmem:[%s193 + $0xd0] sm:$0xff]
        %v258 = vld [vmem:[%s193 + $0xd8] sm:$0xff]
        %v259 = vld [vmem:[%s193 + $0xe0] sm:$0xff]
        %v260 = vld [vmem:[%s193 + $0xe8] sm:$0xff]
        %v261 = vld [vmem:[%s193 + $0xf0] sm:$0xff]
        %v262 = vld [vmem:[%s193 + $0xf8] sm:$0xff]
        %v263 = vld [vmem:[%s193 + $0x100] sm:$0xff]
        %v264 = vld [vmem:[%s193 + $0x108] sm:$0xff]
        %v265 = vld [vmem:[%s193 + $0x110] sm:$0xff]
        %v266 = vld [vmem:[%s193 + $0x118] sm:$0xff]
        %v267 = vld [vmem:[%s193 + $0x120] sm:$0xff]
        %v268 = vld [vmem:[%s193 + $0x128] sm:$0xff]
        %v269 = vld [vmem:[%s193 + $0x130] sm:$0xff]
        %v270 = vld [vmem:[%s193 + $0x138] sm:$0xff]
        %v271 = vld [vmem:[%s193 + $0x140] sm:$0xff]
        %v272 = vld [vmem:[%s193 + $0x148] sm:$0xff]
        %v273 = vld [vmem:[%s193 + $0x150] sm:$0xff]
        %v274 = vld [vmem:[%s193 + $0x158] sm:$0xff]
        %v275 = vld [vmem:[%s193 + $0x160] sm:$0xff]
        %v276 = vld [vmem:[%s193 + $0x168] sm:$0xff]
        %v277 = vld [vmem:[%s193 + $0x170] sm:$0xff]
        %v278 = vld [vmem:[%s193 + $0x178] sm:$0xff]
        %v279 = vld [vmem:[%s193 + $0x180] sm:$0xff]
        %v280 = vld [vmem:[%s193 + $0x188] sm:$0xff]
        %v281 = vld [vmem:[%s193 + $0x190] sm:$0xff]
        %v282 = vld [vmem:[%s193 + $0x198] sm:$0xff]
        %v283 = vld [vmem:[%s193 + $0x1a0] sm:$0xff]
        %v284 = vld [vmem:[%s193 + $0x1a8] sm:$0xff]
        %v285 = vld [vmem:[%s193 + $0x1b0] sm:$0xff]
        %v286 = vld [vmem:[%s193 + $0x1b8] sm:$0xff]
        %v287 = vld [vmem:[%s193 + $0x1c0] sm:$0xff]
        %v288 = vld [vmem:[%s193 + $0x1c8] sm:$0xff]
        %v289 = vld [vmem:[%s193 + $0x1d0] sm:$0xff]
        %v290 = vld [vmem:[%s193 + $0x1d8] sm:$0xff]
        %v291 = vld [vmem:[%s193 + $0x1e0] sm:$0xff]
        %v292 = vld [vmem:[%s193 + $0x1e8] sm:$0xff]
        %v293 = vld [vmem:[%s193 + $0x1f0] sm:$0xff]
        %v294 = vld [vmem:[%s193 + $0x1f8] sm:$0xff]
        %v295 = vld [vmem:[%s1] sm:$0xff]
        %v296 = vld [vmem:[%s1 + $0x8] sm:$0xff]
        %v297 = vld [vmem:[%s1 + $0x10] sm:$0xff]
        %v298 = vld [vmem:[%s1 + $0x18] sm:$0xff]
        %v299 = vld [vmem:[%s1 + $0x20] sm:$0xff]
        %v300 = vld [vmem:[%s1 + $0x28] sm:$0xff]
        %v301 = vld [vmem:[%s1 + $0x30] sm:$0xff]
        %v302 = vld [vmem:[%s1 + $0x38] sm:$0xff]
        %v303 = vld [vmem:[%s1 + $0x40] sm:$0xff]
        %v304 = vld [vmem:[%s1 + $0x48] sm:$0xff]
        %v305 = vld [vmem:[%s1 + $0x50] sm:$0xff]
        %v306 = vld [vmem:[%s1 + $0x58] sm:$0xff]
        %v307 = vld [vmem:[%s1 + $0x60] sm:$0xff]
        %v308 = vld [vmem:[%s1 + $0x68] sm:$0xff]
        %v309 = vld [vmem:[%s1 + $0x70] sm:$0xff]
        %v310 = vld [vmem:[%s1 + $0x78] sm:$0xff]
        %v311 = vld [vmem:[%s1 + $0x80] sm:$0xff]
        %v312 = vld [vmem:[%s1 + $0x88] sm:$0xff]
        %v313 = vld [vmem:[%s1 + $0x90] sm:$0xff]
        %v314 = vld [vmem:[%s1 + $0x98] sm:$0xff]
        %v315 = vld [vmem:[%s1 + $0xa0] sm:$0xff]
        %v316 = vld [vmem:[%s1 + $0xa8] sm:$0xff]
        %v317 = vld [vmem:[%s1 + $0xb0] sm:$0xff]
        %v318 = vld [vmem:[%s1 + $0xb8] sm:$0xff]
        %v319 = vld [vmem:[%s1 + $0xc0] sm:$0xff]
        %v320 = vld [vmem:[%s1 + $0xc8] sm:$0xff]
        %v321 = vld [vmem:[%s1 + $0xd0] sm:$0xff]
        %v322 = vld [vmem:[%s1 + $0xd8] sm:$0xff]
        %v323 = vld [vmem:[%s1 + $0xe0] sm:$0xff]
        %v324 = vld [vmem:[%s1 + $0xe8] sm:$0xff]
        %v325 = vld [vmem:[%s1 + $0xf0] sm:$0xff]
        %v326 = vld [vmem:[%s1 + $0xf8] sm:$0xff]
        %327 = vmatpush.msra.mxu0 %v310
        %328 = vmatpush.msra.mxu0 %v309
        %329 = vmatpush.msra.mxu0 %v308
        %330 = vmatpush.msra.mxu0 %v307
        %331 = vmatpush.msra.mxu0 %v306
        %332 = vmatpush.msra.mxu0 %v305
        %333 = vmatpush.msra.mxu0 %v304
        %334 = vmatpush.msra.mxu0 %v303
        %335 = vmatpush.msra.mxu0 %v302
        %336 = vmatpush.msra.mxu0 %v301
        %337 = vmatpush.msra.mxu0 %v300
        %338 = vmatpush.msra.mxu0 %v299
        %339 = vmatpush.msra.mxu0 %v298
        %340 = vmatpush.msra.mxu0 %v297
        %341 = vmatpush.msra.mxu0 %v296
        %342 = vmatpush.msra.mxu0 %v295
        %343 = vmatmul.f32.gmra.mxu0 %v231
        %v344 = vpop.f32.mrf.mxu0
        %v345 = vadd.f32 0.0, %v344
        %346 = vmatmul.f32.gmra.mxu0 %v233
        %v347 = vpop.f32.mrf.mxu0
        %v348 = vadd.f32 0.0, %v347
        %349 = vmatmul.f32.gmra.mxu0 %v235
        %v350 = vpop.f32.mrf.mxu0
        %v351 = vadd.f32 0.0, %v350
        %352 = vmatmul.f32.gmra.mxu0 %v237
        %v353 = vpop.f32.mrf.mxu0
        %v354 = vadd.f32 0.0, %v353
        %355 = vmatmul.f32.gmra.mxu0 %v239
        %v356 = vpop.f32.mrf.mxu0
        %v357 = vadd.f32 0.0, %v356
        %358 = vmatmul.f32.gmra.mxu0 %v241
        %v359 = vpop.f32.mrf.mxu0
        %v360 = vadd.f32 0.0, %v359
        %361 = vmatmul.f32.gmra.mxu0 %v243
        %v362 = vpop.f32.mrf.mxu0
        %v363 = vadd.f32 0.0, %v362
        %364 = vmatmul.f32.gmra.mxu0 %v245
        %v365 = vpop.f32.mrf.mxu0
        %v366 = vadd.f32 0.0, %v365
        %367 = vmatmul.f32.gmra.mxu0 %v247
        %v368 = vpop.f32.mrf.mxu0
        %v369 = vadd.f32 0.0, %v368
        %370 = vmatmul.f32.gmra.mxu0 %v249
        %v371 = vpop.f32.mrf.mxu0
        %v372 = vadd.f32 0.0, %v371
        %373 = vmatmul.f32.gmra.mxu0 %v251
        %v374 = vpop.f32.mrf.mxu0
        %v375 = vadd.f32 0.0, %v374
        %376 = vmatmul.f32.gmra.mxu0 %v253
        %v377 = vpop.f32.mrf.mxu0
        %v378 = vadd.f32 0.0, %v377
        %379 = vmatmul.f32.gmra.mxu0 %v255
        %v380 = vpop.f32.mrf.mxu0
        %v381 = vadd.f32 0.0, %v380
        %382 = vmatmul.f32.gmra.mxu0 %v257
        %v383 = vpop.f32.mrf.mxu0
        %v384 = vadd.f32 0.0, %v383
        %385 = vmatmul.f32.gmra.mxu0 %v259
        %v386 = vpop.f32.mrf.mxu0
        %v387 = vadd.f32 0.0, %v386
        %388 = vmatmul.f32.gmra.mxu0 %v261
        %v389 = vpop.f32.mrf.mxu0
        %v390 = vadd.f32 0.0, %v389
        %391 = vmatmul.f32.gmra.mxu0 %v263
        %v392 = vpop.f32.mrf.mxu0
        %v393 = vadd.f32 0.0, %v392
        %394 = vmatmul.f32.gmra.mxu0 %v265
        %v395 = vpop.f32.mrf.mxu0
        %v396 = vadd.f32 0.0, %v395
        %397 = vmatmul.f32.gmra.mxu0 %v267
        %v398 = vpop.f32.mrf.mxu0
        %v399 = vadd.f32 0.0, %v398
        %400 = vmatmul.f32.gmra.mxu0 %v269
        %v401 = vpop.f32.mrf.mxu0
        %v402 = vadd.f32 0.0, %v401
        %403 = vmatmul.f32.gmra.mxu0 %v271
        %v404 = vpop.f32.mrf.mxu0
        %v405 = vadd.f32 0.0, %v404
        %406 = vmatmul.f32.gmra.mxu0 %v273
        %v407 = vpop.f32.mrf.mxu0
        %v408 = vadd.f32 0.0, %v407
        %409 = vmatmul.f32.gmra.mxu0 %v275
        %v410 = vpop.f32.mrf.mxu0
        %v411 = vadd.f32 0.0, %v410
        %412 = vmatmul.f32.gmra.mxu0 %v277
        %v413 = vpop.f32.mrf.mxu0
        %v414 = vadd.f32 0.0, %v413
        %415 = vmatmul.f32.gmra.mxu0 %v279
        %v416 = vpop.f32.mrf.mxu0
        %v417 = vadd.f32 0.0, %v416
        %418 = vmatmul.f32.gmra.mxu0 %v281
        %v419 = vpop.f32.mrf.mxu0
        %v420 = vadd.f32 0.0, %v419
        %421 = vmatmul.f32.gmra.mxu0 %v283
        %v422 = vpop.f32.mrf.mxu0
        %v423 = vadd.f32 0.0, %v422
        %424 = vmatmul.f32.gmra.mxu0 %v285
        %v425 = vpop.f32.mrf.mxu0
        %v426 = vadd.f32 0.0, %v425
        %427 = vmatmul.f32.gmra.mxu0 %v287
        %v428 = vpop.f32.mrf.mxu0
        %v429 = vadd.f32 0.0, %v428
        %430 = vmatmul.f32.gmra.mxu0 %v289
        %v431 = vpop.f32.mrf.mxu0
        %v432 = vadd.f32 0.0, %v431
        %433 = vmatmul.f32.gmra.mxu0 %v291
        %v434 = vpop.f32.mrf.mxu0
        %v435 = vadd.f32 0.0, %v434
        %436 = vmatmul.f32.gmra.mxu0 %v293
        %v437 = vpop.f32.mrf.mxu0
        %v438 = vadd.f32 0.0, %v437
        %439 = vdwg.mxu0
        %440 = vmatpush.msra.mxu0 %v326
        %441 = vmatpush.msra.mxu0 %v325
        %442 = vmatpush.msra.mxu0 %v324
        %443 = vmatpush.msra.mxu0 %v323
        %444 = vmatpush.msra.mxu0 %v322
        %445 = vmatpush.msra.mxu0 %v321
        %446 = vmatpush.msra.mxu0 %v320
        %447 = vmatpush.msra.mxu0 %v319
        %448 = vmatpush.msra.mxu0 %v318
        %449 = vmatpush.msra.mxu0 %v317
        %450 = vmatpush.msra.mxu0 %v316
        %451 = vmatpush.msra.mxu0 %v315
        %452 = vmatpush.msra.mxu0 %v314
        %453 = vmatpush.msra.mxu0 %v313
        %454 = vmatpush.msra.mxu0 %v312
        %455 = vmatpush.msra.mxu0 %v311
        %456 = vmatmul.f32.gmra.mxu0 %v232
        %v457 = vpop.f32.mrf.mxu0
        %v458 = vadd.f32 %v345, %v457
        %459 = vmatmul.f32.gmra.mxu0 %v234
        %v460 = vpop.f32.mrf.mxu0
        %v461 = vadd.f32 %v348, %v460
        %462 = vmatmul.f32.gmra.mxu0 %v236
        %v463 = vpop.f32.mrf.mxu0
        %v464 = vadd.f32 %v351, %v463
        %465 = vmatmul.f32.gmra.mxu0 %v238
        %v466 = vpop.f32.mrf.mxu0
        %v467 = vadd.f32 %v354, %v466
        %468 = vmatmul.f32.gmra.mxu0 %v240
        %v469 = vpop.f32.mrf.mxu0
        %v470 = vadd.f32 %v357, %v469
        %471 = vmatmul.f32.gmra.mxu0 %v242
        %v472 = vpop.f32.mrf.mxu0
        %v473 = vadd.f32 %v360, %v472
        %474 = vmatmul.f32.gmra.mxu0 %v244
        %v475 = vpop.f32.mrf.mxu0
        %v476 = vadd.f32 %v363, %v475
        %477 = vmatmul.f32.gmra.mxu0 %v246
        %v478 = vpop.f32.mrf.mxu0
        %v479 = vadd.f32 %v366, %v478
        %480 = vmatmul.f32.gmra.mxu0 %v248
        %v481 = vpop.f32.mrf.mxu0
        %v482 = vadd.f32 %v369, %v481
        %483 = vmatmul.f32.gmra.mxu0 %v250
        %v484 = vpop.f32.mrf.mxu0
        %v485 = vadd.f32 %v372, %v484
        %486 = vmatmul.f32.gmra.mxu0 %v252
        %v487 = vpop.f32.mrf.mxu0
        %v488 = vadd.f32 %v375, %v487
        %489 = vmatmul.f32.gmra.mxu0 %v254
        %v490 = vpop.f32.mrf.mxu0
        %v491 = vadd.f32 %v378, %v490
        %492 = vmatmul.f32.gmra.mxu0 %v256
        %v493 = vpop.f32.mrf.mxu0
        %v494 = vadd.f32 %v381, %v493
        %495 = vmatmul.f32.gmra.mxu0 %v258
        %v496 = vpop.f32.mrf.mxu0
        %v497 = vadd.f32 %v384, %v496
        %498 = vmatmul.f32.gmra.mxu0 %v260
        %v499 = vpop.f32.mrf.mxu0
        %v500 = vadd.f32 %v387, %v499
        %501 = vmatmul.f32.gmra.mxu0 %v262
        %v502 = vpop.f32.mrf.mxu0
        %v503 = vadd.f32 %v390, %v502
        %504 = vmatmul.f32.gmra.mxu0 %v264
        %v505 = vpop.f32.mrf.mxu0
        %v506 = vadd.f32 %v393, %v505
        %507 = vmatmul.f32.gmra.mxu0 %v266
        %v508 = vpop.f32.mrf.mxu0
        %v509 = vadd.f32 %v396, %v508
        %510 = vmatmul.f32.gmra.mxu0 %v268
        %v511 = vpop.f32.mrf.mxu0
        %v512 = vadd.f32 %v399, %v511
        %513 = vmatmul.f32.gmra.mxu0 %v270
        %v514 = vpop.f32.mrf.mxu0
        %v515 = vadd.f32 %v402, %v514
        %516 = vmatmul.f32.gmra.mxu0 %v272
        %v517 = vpop.f32.mrf.mxu0
        %v518 = vadd.f32 %v405, %v517
        %519 = vmatmul.f32.gmra.mxu0 %v274
        %v520 = vpop.f32.mrf.mxu0
        %v521 = vadd.f32 %v408, %v520
        %522 = vmatmul.f32.gmra.mxu0 %v276
        %v523 = vpop.f32.mrf.mxu0
        %v524 = vadd.f32 %v411, %v523
        %525 = vmatmul.f32.gmra.mxu0 %v278
        %v526 = vpop.f32.mrf.mxu0
        %v527 = vadd.f32 %v414, %v526
        %528 = vmatmul.f32.gmra.mxu0 %v280
        %v529 = vpop.f32.mrf.mxu0
        %v530 = vadd.f32 %v417, %v529
        %531 = vmatmul.f32.gmra.mxu0 %v282
        %v532 = vpop.f32.mrf.mxu0
        %v533 = vadd.f32 %v420, %v532
        %534 = vmatmul.f32.gmra.mxu0 %v284
        %v535 = vpop.f32.mrf.mxu0
        %v536 = vadd.f32 %v423, %v535
        %537 = vmatmul.f32.gmra.mxu0 %v286
        %v538 = vpop.f32.mrf.mxu0
        %v539 = vadd.f32 %v426, %v538
        %540 = vmatmul.f32.gmra.mxu0 %v288
        %v541 = vpop.f32.mrf.mxu0
        %v542 = vadd.f32 %v429, %v541
        %543 = vmatmul.f32.gmra.mxu0 %v290
        %v544 = vpop.f32.mrf.mxu0
        %v545 = vadd.f32 %v432, %v544
        %546 = vmatmul.f32.gmra.mxu0 %v292
        %v547 = vpop.f32.mrf.mxu0
        %v548 = vadd.f32 %v435, %v547
        %549 = vmatmul.f32.gmra.mxu0 %v294
        %v550 = vpop.f32.mrf.mxu0
        %v551 = vadd.f32 %v438, %v550
        %552 = vdwg.mxu0
        %v553 = vmul.f32 %v458, 2.0
        %v554 = vmul.f32 %v461, 2.0
        %v555 = vmul.f32 %v464, 2.0
        %v556 = vmul.f32 %v467, 2.0
        %v557 = vmul.f32 %v470, 2.0
        %v558 = vmul.f32 %v473, 2.0
        %v559 = vmul.f32 %v476, 2.0
        %v560 = vmul.f32 %v479, 2.0
        %v561 = vmul.f32 %v482, 2.0
        %v562 = vmul.f32 %v485, 2.0
        %v563 = vmul.f32 %v488, 2.0
        %v564 = vmul.f32 %v491, 2.0
        %v565 = vmul.f32 %v494, 2.0
        %v566 = vmul.f32 %v497, 2.0
        %v567 = vmul.f32 %v500, 2.0
        %v568 = vmul.f32 %v503, 2.0
        %v569 = vmul.f32 %v506, 2.0
        %v570 = vmul.f32 %v509, 2.0
        %v571 = vmul.f32 %v512, 2.0
        %v572 = vmul.f32 %v515, 2.0
        %v573 = vmul.f32 %v518, 2.0
        %v574 = vmul.f32 %v521, 2.0
        %v575 = vmul.f32 %v524, 2.0
        %v576 = vmul.f32 %v527, 2.0
        %v577 = vmul.f32 %v530, 2.0
        %v578 = vmul.f32 %v533, 2.0
        %v579 = vmul.f32 %v536, 2.0
        %v580 = vmul.f32 %v539, 2.0
        %v581 = vmul.f32 %v542, 2.0
        %v582 = vmul.f32 %v545, 2.0
        %v583 = vmul.f32 %v548, 2.0
        %v584 = vmul.f32 %v551, 2.0
        %v585 = vld [vmem:[%s227] sm:$0xff]
        %v586 = vld [vmem:[%s227 + $0x8] sm:$0xff]
        %vm587 = vcmask 64512
        %v589 = vsel %vm587, %v553, 0
        %v592 = vsel %vm587, %v554, 0
        %v595 = vsel %vm587, %v555, 0
        %v598 = vsel %vm587, %v556, 0
        %v601 = vsel %vm587, %v557, 0
        %v604 = vsel %vm587, %v558, 0
        %v607 = vsel %vm587, %v559, 0
        %v610 = vsel %vm587, %v560, 0
        %v613 = vsel %vm587, %v561, 0
        %v616 = vsel %vm587, %v562, 0
        %v619 = vsel %vm587, %v563, 0
        %v622 = vsel %vm587, %v564, 0
        %v625 = vsel %vm587, %v565, 0
        %v628 = vsel %vm587, %v566, 0
        %v631 = vsel %vm587, %v567, 0
        %v634 = vsel %vm587, %v568, 0
        %v637 = vsel %vm587, %v569, 0
        %v640 = vsel %vm587, %v570, 0
        %v643 = vsel %vm587, %v571, 0
        %v646 = vsel %vm587, %v572, 0
        %v649 = vsel %vm587, %v573, 0
        %v652 = vsel %vm587, %v574, 0
        %v655 = vsel %vm587, %v575, 0
        %v658 = vsel %vm587, %v576, 0
        %v661 = vsel %vm587, %v577, 0
        %v664 = vsel %vm587, %v578, 0
        %v667 = vsel %vm587, %v579, 0
        %v670 = vsel %vm587, %v580, 0
        %v673 = vsel %vm587, %v581, 0
        %v676 = vsel %vm587, %v582, 0
        %v679 = vsel %vm587, %v583, 0
        %v682 = vsel %vm587, %v584, 0
        %684 = vmatpush.msra.mxu0 0.0
        %685 = vmatpush.msra.mxu0 0.0
        %686 = vmatpush.msra.mxu0 0.0
        %687 = vmatpush.msra.mxu0 0.0
        %688 = vmatpush.msra.mxu0 0.0
        %689 = vmatpush.msra.mxu0 0.0
        %690 = vmatpush.msra.mxu0 0.0
        %691 = vmatpush.msra.mxu0 0.0
        %692 = vmatpush.msra.mxu0 0.0
        %693 = vmatpush.msra.mxu0 0.0
        %694 = vmatpush.msra.mxu0 0.0
        %695 = vmatpush.msra.mxu0 0.0
        %696 = vmatpush.msra.mxu0 0.0
        %697 = vmatpush.msra.mxu0 0.0
        %698 = vmatpush.msra.mxu0 0.0
        %699 = vmatpush.msra.mxu0 %v585
        %700 = vmatmul.f32.gmra.mxu0 %v589
        %v701 = vpop.f32.mrf.mxu0
        %v702 = vadd.f32 0.0, %v701
        %703 = vmatmul.f32.gmra.mxu0 %v592
        %v704 = vpop.f32.mrf.mxu0
        %v705 = vadd.f32 0.0, %v704
        %706 = vmatmul.f32.gmra.mxu0 %v595
        %v707 = vpop.f32.mrf.mxu0
        %v708 = vadd.f32 0.0, %v707
        %709 = vmatmul.f32.gmra.mxu0 %v598
        %v710 = vpop.f32.mrf.mxu0
        %v711 = vadd.f32 0.0, %v710
        %712 = vmatmul.f32.gmra.mxu0 %v601
        %v713 = vpop.f32.mrf.mxu0
        %v714 = vadd.f32 0.0, %v713
        %715 = vmatmul.f32.gmra.mxu0 %v604
        %v716 = vpop.f32.mrf.mxu0
        %v717 = vadd.f32 0.0, %v716
        %718 = vmatmul.f32.gmra.mxu0 %v607
        %v719 = vpop.f32.mrf.mxu0
        %v720 = vadd.f32 0.0, %v719
        %721 = vmatmul.f32.gmra.mxu0 %v610
        %v722 = vpop.f32.mrf.mxu0
        %v723 = vadd.f32 0.0, %v722
        %724 = vmatmul.f32.gmra.mxu0 %v613
        %v725 = vpop.f32.mrf.mxu0
        %v726 = vadd.f32 0.0, %v725
        %727 = vmatmul.f32.gmra.mxu0 %v616
        %v728 = vpop.f32.mrf.mxu0
        %v729 = vadd.f32 0.0, %v728
        %730 = vmatmul.f32.gmra.mxu0 %v619
        %v731 = vpop.f32.mrf.mxu0
        %v732 = vadd.f32 0.0, %v731
        %733 = vmatmul.f32.gmra.mxu0 %v622
        %v734 = vpop.f32.mrf.mxu0
        %v735 = vadd.f32 0.0, %v734
        %736 = vmatmul.f32.gmra.mxu0 %v625
        %v737 = vpop.f32.mrf.mxu0
        %v738 = vadd.f32 0.0, %v737
        %739 = vmatmul.f32.gmra.mxu0 %v628
        %v740 = vpop.f32.mrf.mxu0
        %v741 = vadd.f32 0.0, %v740
        %742 = vmatmul.f32.gmra.mxu0 %v631
        %v743 = vpop.f32.mrf.mxu0
        %v744 = vadd.f32 0.0, %v743
        %745 = vmatmul.f32.gmra.mxu0 %v634
        %v746 = vpop.f32.mrf.mxu0
        %v747 = vadd.f32 0.0, %v746
        %748 = vmatmul.f32.gmra.mxu0 %v637
        %v749 = vpop.f32.mrf.mxu0
        %v750 = vadd.f32 0.0, %v749
        %751 = vmatmul.f32.gmra.mxu0 %v640
        %v752 = vpop.f32.mrf.mxu0
        %v753 = vadd.f32 0.0, %v752
        %754 = vmatmul.f32.gmra.mxu0 %v643
        %v755 = vpop.f32.mrf.mxu0
        %v756 = vadd.f32 0.0, %v755
        %757 = vmatmul.f32.gmra.mxu0 %v646
        %v758 = vpop.f32.mrf.mxu0
        %v759 = vadd.f32 0.0, %v758
        %760 = vmatmul.f32.gmra.mxu0 %v649
        %v761 = vpop.f32.mrf.mxu0
        %v762 = vadd.f32 0.0, %v761
        %763 = vmatmul.f32.gmra.mxu0 %v652
        %v764 = vpop.f32.mrf.mxu0
        %v765 = vadd.f32 0.0, %v764
        %766 = vmatmul.f32.gmra.mxu0 %v655
        %v767 = vpop.f32.mrf.mxu0
        %v768 = vadd.f32 0.0, %v767
        %769 = vmatmul.f32.gmra.mxu0 %v658
        %v770 = vpop.f32.mrf.mxu0
        %v771 = vadd.f32 0.0, %v770
        %772 = vmatmul.f32.gmra.mxu0 %v661
        %v773 = vpop.f32.mrf.mxu0
        %v774 = vadd.f32 0.0, %v773
        %775 = vmatmul.f32.gmra.mxu0 %v664
        %v776 = vpop.f32.mrf.mxu0
        %v777 = vadd.f32 0.0, %v776
        %778 = vmatmul.f32.gmra.mxu0 %v667
        %v779 = vpop.f32.mrf.mxu0
        %v780 = vadd.f32 0.0, %v779
        %781 = vmatmul.f32.gmra.mxu0 %v670
        %v782 = vpop.f32.mrf.mxu0
        %v783 = vadd.f32 0.0, %v782
        %784 = vmatmul.f32.gmra.mxu0 %v673
        %v785 = vpop.f32.mrf.mxu0
        %v786 = vadd.f32 0.0, %v785
        %787 = vmatmul.f32.gmra.mxu0 %v676
        %v788 = vpop.f32.mrf.mxu0
        %v789 = vadd.f32 0.0, %v788
        %790 = vmatmul.f32.gmra.mxu0 %v679
        %v791 = vpop.f32.mrf.mxu0
        %v792 = vadd.f32 0.0, %v791
        %793 = vmatmul.f32.gmra.mxu0 %v682
        %v794 = vpop.f32.mrf.mxu0
        %v795 = vadd.f32 0.0, %v794
        %796 = vdwg.mxu0
        %797 = vmatpush.msra.mxu0 0.0
        %798 = vmatpush.msra.mxu0 0.0
        %799 = vmatpush.msra.mxu0 0.0
        %800 = vmatpush.msra.mxu0 0.0
        %801 = vmatpush.msra.mxu0 0.0
        %802 = vmatpush.msra.mxu0 0.0
        %803 = vmatpush.msra.mxu0 0.0
        %804 = vmatpush.msra.mxu0 0.0
        %805 = vmatpush.msra.mxu0 0.0
        %806 = vmatpush.msra.mxu0 0.0
        %807 = vmatpush.msra.mxu0 0.0
        %808 = vmatpush.msra.mxu0 0.0
        %809 = vmatpush.msra.mxu0 0.0
        %810 = vmatpush.msra.mxu0 0.0
        %811 = vmatpush.msra.mxu0 0.0
        %812 = vmatpush.msra.mxu0 %v586
        %813 = vmatmul.f32.gmra.mxu0 %v589
        %v814 = vpop.f32.mrf.mxu0
        %v815 = vadd.f32 0.0, %v814
        %816 = vmatmul.f32.gmra.mxu0 %v592
        %v817 = vpop.f32.mrf.mxu0
        %v818 = vadd.f32 0.0, %v817
        %819 = vmatmul.f32.gmra.mxu0 %v595
        %v820 = vpop.f32.mrf.mxu0
        %v821 = vadd.f32 0.0, %v820
        %822 = vmatmul.f32.gmra.mxu0 %v598
        %v823 = vpop.f32.mrf.mxu0
        %v824 = vadd.f32 0.0, %v823
        %825 = vmatmul.f32.gmra.mxu0 %v601
        %v826 = vpop.f32.mrf.mxu0
        %v827 = vadd.f32 0.0, %v826
        %828 = vmatmul.f32.gmra.mxu0 %v604
        %v829 = vpop.f32.mrf.mxu0
        %v830 = vadd.f32 0.0, %v829
        %831 = vmatmul.f32.gmra.mxu0 %v607
        %v832 = vpop.f32.mrf.mxu0
        %v833 = vadd.f32 0.0, %v832
        %834 = vmatmul.f32.gmra.mxu0 %v610
        %v835 = vpop.f32.mrf.mxu0
        %v836 = vadd.f32 0.0, %v835
        %837 = vmatmul.f32.gmra.mxu0 %v613
        %v838 = vpop.f32.mrf.mxu0
        %v839 = vadd.f32 0.0, %v838
        %840 = vmatmul.f32.gmra.mxu0 %v616
        %v841 = vpop.f32.mrf.mxu0
        %v842 = vadd.f32 0.0, %v841
        %843 = vmatmul.f32.gmra.mxu0 %v619
        %v844 = vpop.f32.mrf.mxu0
        %v845 = vadd.f32 0.0, %v844
        %846 = vmatmul.f32.gmra.mxu0 %v622
        %v847 = vpop.f32.mrf.mxu0
        %v848 = vadd.f32 0.0, %v847
        %849 = vmatmul.f32.gmra.mxu0 %v625
        %v850 = vpop.f32.mrf.mxu0
        %v851 = vadd.f32 0.0, %v850
        %852 = vmatmul.f32.gmra.mxu0 %v628
        %v853 = vpop.f32.mrf.mxu0
        %v854 = vadd.f32 0.0, %v853
        %855 = vmatmul.f32.gmra.mxu0 %v631
        %v856 = vpop.f32.mrf.mxu0
        %v857 = vadd.f32 0.0, %v856
        %858 = vmatmul.f32.gmra.mxu0 %v634
        %v859 = vpop.f32.mrf.mxu0
        %v860 = vadd.f32 0.0, %v859
        %861 = vmatmul.f32.gmra.mxu0 %v637
        %v862 = vpop.f32.mrf.mxu0
        %v863 = vadd.f32 0.0, %v862
        %864 = vmatmul.f32.gmra.mxu0 %v640
        %v865 = vpop.f32.mrf.mxu0
        %v866 = vadd.f32 0.0, %v865
        %867 = vmatmul.f32.gmra.mxu0 %v643
        %v868 = vpop.f32.mrf.mxu0
        %v869 = vadd.f32 0.0, %v868
        %870 = vmatmul.f32.gmra.mxu0 %v646
        %v871 = vpop.f32.mrf.mxu0
        %v872 = vadd.f32 0.0, %v871
        %873 = vmatmul.f32.gmra.mxu0 %v649
        %v874 = vpop.f32.mrf.mxu0
        %v875 = vadd.f32 0.0, %v874
        %876 = vmatmul.f32.gmra.mxu0 %v652
        %v877 = vpop.f32.mrf.mxu0
        %v878 = vadd.f32 0.0, %v877
        %879 = vmatmul.f32.gmra.mxu0 %v655
        %v880 = vpop.f32.mrf.mxu0
        %v881 = vadd.f32 0.0, %v880
        %882 = vmatmul.f32.gmra.mxu0 %v658
        %v883 = vpop.f32.mrf.mxu0
        %v884 = vadd.f32 0.0, %v883
        %885 = vmatmul.f32.gmra.mxu0 %v661
        %v886 = vpop.f32.mrf.mxu0
        %v887 = vadd.f32 0.0, %v886
        %888 = vmatmul.f32.gmra.mxu0 %v664
        %v889 = vpop.f32.mrf.mxu0
        %v890 = vadd.f32 0.0, %v889
        %891 = vmatmul.f32.gmra.mxu0 %v667
        %v892 = vpop.f32.mrf.mxu0
        %v893 = vadd.f32 0.0, %v892
        %894 = vmatmul.f32.gmra.mxu0 %v670
        %v895 = vpop.f32.mrf.mxu0
        %v896 = vadd.f32 0.0, %v895
        %897 = vmatmul.f32.gmra.mxu0 %v673
        %v898 = vpop.f32.mrf.mxu0
        %v899 = vadd.f32 0.0, %v898
        %900 = vmatmul.f32.gmra.mxu0 %v676
        %v901 = vpop.f32.mrf.mxu0
        %v902 = vadd.f32 0.0, %v901
        %903 = vmatmul.f32.gmra.mxu0 %v679
        %v904 = vpop.f32.mrf.mxu0
        %v905 = vadd.f32 0.0, %v904
        %906 = vmatmul.f32.gmra.mxu0 %v682
        %v907 = vpop.f32.mrf.mxu0
        %v908 = vadd.f32 0.0, %v907
        %909 = vdwg.mxu0
        %910 = vst [vmem:[%s221] sm:$0xff] %v702
        %911 = vst [vmem:[%s221 + $0x8] sm:$0xff] %v815
        %912 = vst [vmem:[%s221 + $0x10] sm:$0xff] %v705
        %913 = vst [vmem:[%s221 + $0x18] sm:$0xff] %v818
        %914 = vst [vmem:[%s221 + $0x20] sm:$0xff] %v708
        %915 = vst [vmem:[%s221 + $0x28] sm:$0xff] %v821
        %916 = vst [vmem:[%s221 + $0x30] sm:$0xff] %v711
        %917 = vst [vmem:[%s221 + $0x38] sm:$0xff] %v824
        %918 = vst [vmem:[%s221 + $0x40] sm:$0xff] %v714
        %919 = vst [vmem:[%s221 + $0x48] sm:$0xff] %v827
        %920 = vst [vmem:[%s221 + $0x50] sm:$0xff] %v717
        %921 = vst [vmem:[%s221 + $0x58] sm:$0xff] %v830
        %922 = vst [vmem:[%s221 + $0x60] sm:$0xff] %v720
        %923 = vst [vmem:[%s221 + $0x68] sm:$0xff] %v833
        %924 = vst [vmem:[%s221 + $0x70] sm:$0xff] %v723
        %925 = vst [vmem:[%s221 + $0x78] sm:$0xff] %v836
        %926 = vst [vmem:[%s221 + $0x80] sm:$0xff] %v726
        %927 = vst [vmem:[%s221 + $0x88] sm:$0xff] %v839
        %928 = vst [vmem:[%s221 + $0x90] sm:$0xff] %v729
        %929 = vst [vmem:[%s221 + $0x98] sm:$0xff] %v842
        %930 = vst [vmem:[%s221 + $0xa0] sm:$0xff] %v732
        %931 = vst [vmem:[%s221 + $0xa8] sm:$0xff] %v845
        %932 = vst [vmem:[%s221 + $0xb0] sm:$0xff] %v735
        %933 = vst [vmem:[%s221 + $0xb8] sm:$0xff] %v848
        %934 = vst [vmem:[%s221 + $0xc0] sm:$0xff] %v738
        %935 = vst [vmem:[%s221 + $0xc8] sm:$0xff] %v851
        %936 = vst [vmem:[%s221 + $0xd0] sm:$0xff] %v741
        %937 = vst [vmem:[%s221 + $0xd8] sm:$0xff] %v854
        %938 = vst [vmem:[%s221 + $0xe0] sm:$0xff] %v744
        %939 = vst [vmem:[%s221 + $0xe8] sm:$0xff] %v857
        %940 = vst [vmem:[%s221 + $0xf0] sm:$0xff] %v747
        %941 = vst [vmem:[%s221 + $0xf8] sm:$0xff] %v860
        %942 = vst [vmem:[%s221 + $0x100] sm:$0xff] %v750
        %943 = vst [vmem:[%s221 + $0x108] sm:$0xff] %v863
        %944 = vst [vmem:[%s221 + $0x110] sm:$0xff] %v753
        %945 = vst [vmem:[%s221 + $0x118] sm:$0xff] %v866
        %946 = vst [vmem:[%s221 + $0x120] sm:$0xff] %v756
        %947 = vst [vmem:[%s221 + $0x128] sm:$0xff] %v869
        %948 = vst [vmem:[%s221 + $0x130] sm:$0xff] %v759
        %949 = vst [vmem:[%s221 + $0x138] sm:$0xff] %v872
        %950 = vst [vmem:[%s221 + $0x140] sm:$0xff] %v762
        %951 = vst [vmem:[%s221 + $0x148] sm:$0xff] %v875
        %952 = vst [vmem:[%s221 + $0x150] sm:$0xff] %v765
        %953 = vst [vmem:[%s221 + $0x158] sm:$0xff] %v878
        %954 = vst [vmem:[%s221 + $0x160] sm:$0xff] %v768
        %955 = vst [vmem:[%s221 + $0x168] sm:$0xff] %v881
        %956 = vst [vmem:[%s221 + $0x170] sm:$0xff] %v771
        %957 = vst [vmem:[%s221 + $0x178] sm:$0xff] %v884
        %958 = vst [vmem:[%s221 + $0x180] sm:$0xff] %v774
        %959 = vst [vmem:[%s221 + $0x188] sm:$0xff] %v887
        %960 = vst [vmem:[%s221 + $0x190] sm:$0xff] %v777
        %961 = vst [vmem:[%s221 + $0x198] sm:$0xff] %v890
        %962 = vst [vmem:[%s221 + $0x1a0] sm:$0xff] %v780
        %963 = vst [vmem:[%s221 + $0x1a8] sm:$0xff] %v893
        %964 = vst [vmem:[%s221 + $0x1b0] sm:$0xff] %v783
        %965 = vst [vmem:[%s221 + $0x1b8] sm:$0xff] %v896
        %966 = vst [vmem:[%s221 + $0x1c0] sm:$0xff] %v786
        %967 = vst [vmem:[%s221 + $0x1c8] sm:$0xff] %v899
        %968 = vst [vmem:[%s221 + $0x1d0] sm:$0xff] %v789
        %969 = vst [vmem:[%s221 + $0x1d8] sm:$0xff] %v902
        %970 = vst [vmem:[%s221 + $0x1e0] sm:$0xff] %v792
        %971 = vst [vmem:[%s221 + $0x1e8] sm:$0xff] %v905
        %972 = vst [vmem:[%s221 + $0x1f0] sm:$0xff] %v795
        %973 = vst [vmem:[%s221 + $0x1f8] sm:$0xff] %v908
        %s974 = sand.u32 %s115, 1
        %s975 = scalar_lea.sflag [#allocation4], %s974
        %s976 = sand.u32 %s115, 1
        %s977 = smul.addr %s976, 512
        %s978 = scalar_lea.vmem [#allocation5], %s977
        // Predicated region
        $region37: #{tpu_custom_call.1} parent=31 // pred_check
          %p979 = pneg %p125
        $region38: #{tpu_custom_call.1} parent=31 // pred_check_branch
          %981 = sbr.rel (%p979) target = $region40
        $region39: #{tpu_custom_call.1} parent=31 // pred_region
          %s982 = smul.u32 32, %s24
          %s983 = smul.u32 2, %s25
          %985 = vsyncadd %s975, 0
          %s986 = smul.addr %s982, 2
          %s987 = sadd.s32 %s983, %s986
          %s988 = smul.addr %s987, 8
          %s989 = scalar_lea.hbm %s3, %s988
          %s990 = sshll.u32 %s978, 4
          %s991 = int_to_ptr.vmem [resolvable:$true] %s990
          %s992 = sshll.u32 %s989, 4
          %s993 = int_to_ptr.hbm [resolvable:$true] %s992
          %998 = dma.vmem_to_hbm [thread:$0]  %s991, 8192, %s993, %s975, 256, 256, 16
        $region40: #{tpu_custom_call.1} parent=31 // pred_fallthru
          _
      $region32: #{tpu_custom_call.1} parent=5 // pred_fallthru
        _
      %p999 = scmp.le.s32.totalorder 2, %s15
      // Predicated region
      $region41: #{tpu_custom_call.1} parent=5 // pred_check
        %p1000 = pneg %p999
      $region42: #{tpu_custom_call.1} parent=5 // pred_check_branch
        %1002 = sbr.rel (%p1000) target = $region44
      $region43: #{tpu_custom_call.1} parent=5 // pred_region
        %s1003 = ssub.s32 %s15, 2
        // Predicated region
        $region45: #{tpu_custom_call.1} parent=43 // pred_check
          %p1004 = pneg %p131
        $region46: #{tpu_custom_call.1} parent=43 // pred_check_branch
          %1006 = sbr.rel (%p1004) target = $region48
        $region47: #{tpu_custom_call.1} parent=43 // pred_region
          %s1007 = sand.u32 %s116, 1
          %s1008 = scalar_lea.sflag [#allocation4], %s1007
          %s1009 = sand.u32 %s116, 1
          %s1010 = smul.addr %s1009, 512
          %s1011 = scalar_lea.vmem [#allocation5], %s1010
          %1013 = dma.done %s1008, 8192
        $region48: #{tpu_custom_call.1} parent=43 // pred_fallthru
          _
      $region44: #{tpu_custom_call.1} parent=5 // pred_fallthru
        _
    $region6: #{tpu_custom_call.1} parent=1 // loop_footer
      %s19 = sadd.s32 1, %s15
    $region7: #{tpu_custom_call.1} parent=1 // loop_footer_branch
      %14 = sbr.rel target = $region3
    $region8: #{tpu_custom_call.1} parent=1 // loop_exit
      _
    %1014 = vsyncpa [#allocation3], 1
    %s1015 = scalar_lea.sflag [#allocation3], 1
    %1016 = vsyncpa %s1015, 1
    %1017 = vsyncpa [#allocation4], 1
    %s1018 = scalar_lea.sflag [#allocation4], 1
    %1019 = vsyncpa %s1018, 1

</llo_original>
